<compile_context>
chip_gen: v5e
topology: v5e:2x2
jax: 0.10.0
libtpu: 0.0.40
codegen_flags: <defaults>
</compile_context>

<pallas_src>
import functools
import math

import jax
import jax.numpy as jnp
from jax.experimental import pallas as pl
from jax.experimental.pallas import tpu as pltpu

NUM_NODES = 150          # hidden width fixed by the PyTorch module
_LANE = 128
_SUBLANE = 8


def _round_up(n, m):
    return ((n + m - 1) // m) * m


def _choose_tiles(B, max_bt):
    """Batch tile choice: cap per-tile VMEM, keep batch padding small
    (bt ~ B / ceil(B/max_bt)), and prefer an even grid (v7x megacore)."""
    Bp = _round_up(max(B, _SUBLANE), _SUBLANE)
    n = -(-Bp // max_bt)                 # ceil div
    if n > 1 and n % 2 == 1:             # even number of steps for 2 TCs
        n += 1
    bt = _round_up(-(-Bp // n), _SUBLANE)
    return bt, n, bt * n


def simplenet_kernel(x_ref, w1_ref, b1_ref, w2_ref, b2_ref, o_ref):
    # x arrives f32; bf16 cast is cheap VPU work hidden under the DMA bottleneck
    x = x_ref[...].astype(jnp.bfloat16)              # (bt, num_inputs)

    # linear1 (MXU, f32 accumulate) + sigmoid via a single EUP tanh
    h = jnp.dot(x, w1_ref[...], preferred_element_type=jnp.float32) + b1_ref[...]
    h = 0.5 * jnp.tanh(0.5 * h) + 0.5                # (bt, H_pad) f32

    # linear2 (MXU, f32 accumulate) + leaky_relu (slope 0.01, as one max)
    y = jnp.dot(h.astype(jnp.bfloat16), w2_ref[...],
                preferred_element_type=jnp.float32) + b2_ref[...]
    o_ref[...] = jnp.maximum(y, 0.01 * y)            # (bt, num_outputs) f32


def prepare_params(w1, b1, w2, b2):
    """One-time padding + bf16 cast of the weights (hoisted out of the forward).
    Weights are stored pre-transposed as (in, out)."""
    num_inputs, hidden = w1.shape
    num_outputs = w2.shape[1]
    H = _round_up(hidden, _LANE)                     # 150 -> 256
    w1p = (jnp.zeros((num_inputs, H), jnp.float32)
           .at[:, :hidden].set(w1).astype(jnp.bfloat16))
    b1p = jnp.zeros((1, H), jnp.float32).at[:, :hidden].set(b1.reshape(1, -1))
    # padded rows [hidden:H] stay exactly zero so sigmoid(0)=0.5 cannot leak
    w2p = (jnp.zeros((H, num_outputs), jnp.float32)
           .at[:hidden, :].set(w2).astype(jnp.bfloat16))
    b2p = b2.reshape(1, num_outputs).astype(jnp.float32)
    return w1p, b1p, w2p, b2p


@functools.partial(jax.jit, static_argnames=("block_b",))
def simplenet_forward(x, w1p, b1p, w2p, b2p, *, block_b=4096):
    """x: (B, num_inputs) f32. Params already prepared via prepare_params()."""
    B, num_inputs = x.shape
    H = w1p.shape[1]
    num_outputs = w2p.shape[1]

    bt, n_tiles, Bp = _choose_tiles(B, block_b)

    # Minimal row padding only (fuses under jit); no lane padding of the output.
    xp = x if Bp == B else jnp.zeros((Bp, num_inputs), x.dtype).at[:B].set(x)

    out = pl.pallas_call(
        simplenet_kernel,
        out_shape=jax.ShapeDtypeStruct((Bp, num_outputs), jnp.float32),
        grid=(n_tiles,),
        in_specs=[
            pl.BlockSpec((bt, num_inputs), lambda i: (i, 0)),        # streamed
            pl.BlockSpec((num_inputs, H), lambda i: (0, 0)),         # resident
            pl.BlockSpec((1, H), lambda i: (0, 0)),                  # resident
            pl.BlockSpec((H, num_outputs), lambda i: (0, 0)),        # resident
            pl.BlockSpec((1, num_outputs), lambda i: (0, 0)),        # resident
        ],
        out_specs=pl.BlockSpec((bt, num_outputs), lambda i: (i, 0)),  # unpadded lanes
        compiler_params=pltpu.CompilerParams(
            dimension_semantics=("parallel",),      # megacore on v7x
            vmem_limit_bytes=32 * 1024 * 1024),     # bt=4096 fits v5e/v6e/v7x
    )(xp, w1p, b1p, w2p, b2p)

    return out if Bp == B else out[:B]


def init_params(key, num_inputs, num_outputs):
    """Deterministic init mimicking PyTorch nn.Linear defaults (U(-1/sqrt(fan_in), +))."""
    k1, k2, k3, k4 = jax.random.split(key, 4)
    bound1 = 1.0 / math.sqrt(num_inputs)
    bound2 = 1.0 / math.sqrt(NUM_NODES)
    # stored pre-transposed: (in, out)
    w1 = jax.random.uniform(k1, (num_inputs, NUM_NODES), jnp.float32, -bound1, bound1)
    b1 = jax.random.uniform(k2, (1, NUM_NODES), jnp.float32, -bound1, bound1)
    w2 = jax.random.uniform(k3, (NUM_NODES, num_outputs), jnp.float32, -bound2, bound2)
    b2 = jax.random.uniform(k4, (1, num_outputs), jnp.float32, -bound2, bound2)
    return w1, b1, w2, b2


def _reference(x, w1, b1, w2, b2):
    h = jax.nn.sigmoid(jnp.dot(x, w1) + b1)
    y = jnp.dot(h, w2) + b2
    return jnp.where(y >= 0, y, 0.01 * y)


if __name__ == "__main__":
    num_inputs, num_outputs = 32, 16

    key = jax.random.PRNGKey(0)
    kx, kp, kx2 = jax.random.split(key, 3)
    w1, b1, w2, b2 = init_params(kp, num_inputs, num_outputs)
    params = prepare_params(w1, b1, w2, b2)          # one-time pad + bf16 cast

    # small-shape check (single tile, no padding)
    batch = 8
    x = jax.random.normal(kx, (batch, num_inputs), jnp.float32)
    out = simplenet_forward(x, *params)
    jax.block_until_ready(out)
    ref = _reference(x, w1, b1, w2, b2)
    assert out.shape == (batch, num_outputs)
    assert bool(jnp.all(jnp.isfinite(out)))
    assert jnp.allclose(out, ref, atol=2e-2, rtol=2e-2), \
        f"max abs err {float(jnp.max(jnp.abs(out - ref)))}"

    # multi-tile + ragged-batch check (exercises padding, even grid, slicing)
    batch2 = 520
    x2 = jax.random.normal(kx2, (batch2, num_inputs), jnp.float32)
    out2 = simplenet_forward(x2, *params, block_b=256)
    jax.block_until_ready(out2)
    ref2 = _reference(x2, w1, b1, w2, b2)
    assert out2.shape == (batch2, num_outputs)
    assert bool(jnp.all(jnp.isfinite(out2)))
    assert jnp.allclose(out2, ref2, atol=2e-2, rtol=2e-2), \
        f"max abs err {float(jnp.max(jnp.abs(out2 - ref2)))}"

    print("KERNEL_OK")
</pallas_src>

<mosaic_0001>
module attributes {stable_mosaic.version = 11 : i64} {
  func.func @simplenet_kernel(%arg0: i32, %arg1: memref<8x32xf32, #tpu.memory_space<vmem>>, %arg2: memref<32x256xbf16, #tpu.memory_space<vmem>>, %arg3: memref<1x256xf32, #tpu.memory_space<vmem>>, %arg4: memref<256x16xbf16, #tpu.memory_space<vmem>>, %arg5: memref<1x16xf32, #tpu.memory_space<vmem>>, %arg6: memref<8x16xf32, #tpu.memory_space<vmem>>) attributes {dimension_semantics = [#tpu.dimension_semantics<parallel>], iteration_bounds = array<i64: 1>, scalar_prefetch = 0 : i64, scratch_operands = 0 : i64, tpu.core_type = #tpu.core_type<tc>, window_params = [{transform_indices = @transform_0, window_bounds = array<i64: 8, 32>}, {pipeline_mode = #tpu.pipeline_mode<synchronous>, transform_indices = @transform_1, window_bounds = array<i64: 32, 256>}, {pipeline_mode = #tpu.pipeline_mode<synchronous>, transform_indices = @transform_2, window_bounds = array<i64: 1, 256>}, {pipeline_mode = #tpu.pipeline_mode<synchronous>, transform_indices = @transform_3, window_bounds = array<i64: 256, 16>}, {pipeline_mode = #tpu.pipeline_mode<synchronous>, transform_indices = @transform_4, window_bounds = array<i64: 1, 16>}, {transform_indices = @transform_5, window_bounds = array<i64: 8, 16>}]} {
    %c0 = arith.constant 0 : index
    %c0_0 = arith.constant 0 : index
    %0 = vector.load %arg1[%c0, %c0_0] : memref<8x32xf32, #tpu.memory_space<vmem>>, vector<8x32xf32>
    %1 = arith.truncf %0 : vector<8x32xf32> to vector<8x32xbf16>
    %c0_1 = arith.constant 0 : index
    %c0_2 = arith.constant 0 : index
    %2 = vector.load %arg2[%c0_1, %c0_2] : memref<32x256xbf16, #tpu.memory_space<vmem>>, vector<32x256xbf16>
    %cst = arith.constant dense<0.000000e+00> : vector<8x256xf32>
    %3 = tpu.matmul %1, %2, %cst {dimension_numbers = #tpu.dot_dimension_numbers<[1], [0], [0], [1], [0, 0, 1, 1], [], []>} : vector<8x32xbf16>, vector<32x256xbf16>, vector<8x256xf32> -> vector<8x256xf32>
    %c0_3 = arith.constant 0 : index
    %c0_4 = arith.constant 0 : index
    %4 = vector.load %arg3[%c0_3, %c0_4] : memref<1x256xf32, #tpu.memory_space<vmem>>, vector<1x256xf32>
    %5 = vector.broadcast %4 : vector<1x256xf32> to vector<8x256xf32>
    %6 = arith.addf %3, %5 : vector<8x256xf32>
    %cst_5 = arith.constant 5.000000e-01 : f32
    %7 = vector.broadcast %cst_5 : f32 to vector<8x256xf32>
    %8 = arith.mulf %7, %6 : vector<8x256xf32>
    %9 = math.tanh %8 : vector<8x256xf32>
    %cst_6 = arith.constant 5.000000e-01 : f32
    %10 = vector.broadcast %cst_6 : f32 to vector<8x256xf32>
    %11 = arith.mulf %10, %9 : vector<8x256xf32>
    %cst_7 = arith.constant 5.000000e-01 : f32
    %12 = vector.broadcast %cst_7 : f32 to vector<8x256xf32>
    %13 = arith.addf %11, %12 : vector<8x256xf32>
    %14 = arith.truncf %13 : vector<8x256xf32> to vector<8x256xbf16>
    %c0_8 = arith.constant 0 : index
    %c0_9 = arith.constant 0 : index
    %15 = vector.load %arg4[%c0_8, %c0_9] : memref<256x16xbf16, #tpu.memory_space<vmem>>, vector<256x16xbf16>
    %cst_10 = arith.constant dense<0.000000e+00> : vector<8x16xf32>
    %16 = tpu.matmul %14, %15, %cst_10 {dimension_numbers = #tpu.dot_dimension_numbers<[1], [0], [0], [1], [0, 0, 1, 1], [], []>} : vector<8x256xbf16>, vector<256x16xbf16>, vector<8x16xf32> -> vector<8x16xf32>
    %c0_11 = arith.constant 0 : index
    %c0_12 = arith.constant 0 : index
    %17 = vector.load %arg5[%c0_11, %c0_12] : memref<1x16xf32, #tpu.memory_space<vmem>>, vector<1x16xf32>
    %18 = vector.broadcast %17 : vector<1x16xf32> to vector<8x16xf32>
    %19 = arith.addf %16, %18 : vector<8x16xf32>
    %cst_13 = arith.constant 0.00999999977 : f32
    %20 = vector.broadcast %cst_13 : f32 to vector<8x16xf32>
    %21 = arith.mulf %20, %19 : vector<8x16xf32>
    %22 = arith.maximumf %19, %21 : vector<8x16xf32>
    %c0_14 = arith.constant 0 : index
    %c0_15 = arith.constant 0 : index
    %23 = vector.load %arg6[%c0_14, %c0_15] : memref<8x16xf32, #tpu.memory_space<vmem>>, vector<8x16xf32>
    tpu.vector_store %arg6[%c0_14, %c0_15], %22 {strides = array<i32>} : memref<8x16xf32, #tpu.memory_space<vmem>>, vector<8x16xf32>,
    return
  }
  func.func @transform_0(%arg0: i32) -> (i32, i32) {
    %c0_i32 = arith.constant 0 : i32
    %c0_i32_0 = arith.constant 0 : i32
    return %arg0, %c0_i32 : i32, i32
  }
  func.func @transform_1(%arg0: i32) -> (i32, i32) {
    %c0_i32 = arith.constant 0 : i32
    %c0_i32_0 = arith.constant 0 : i32
    %c0_i32_1 = arith.constant 0 : i32
    return %c0_i32, %c0_i32_0 : i32, i32
  }
  func.func @transform_2(%arg0: i32) -> (i32, i32) {
    %c0_i32 = arith.constant 0 : i32
    %c0_i32_0 = arith.constant 0 : i32
    %c0_i32_1 = arith.constant 0 : i32
    return %c0_i32, %c0_i32_0 : i32, i32
  }
  func.func @transform_3(%arg0: i32) -> (i32, i32) {
    %c0_i32 = arith.constant 0 : i32
    %c0_i32_0 = arith.constant 0 : i32
    %c0_i32_1 = arith.constant 0 : i32
    return %c0_i32, %c0_i32_0 : i32, i32
  }
  func.func @transform_4(%arg0: i32) -> (i32, i32) {
    %c0_i32 = arith.constant 0 : i32
    %c0_i32_0 = arith.constant 0 : i32
    %c0_i32_1 = arith.constant 0 : i32
    return %c0_i32, %c0_i32_0 : i32, i32
  }
  func.func @transform_5(%arg0: i32) -> (i32, i32) {
    %c0_i32 = arith.constant 0 : i32
    %c0_i32_0 = arith.constant 0 : i32
    return %arg0, %c0_i32 : i32, i32
  }
}

</mosaic_0001>

<llo_original>
// kernel: simplenet_forward.1
$region0: #{simplenet_forward.1}
  #allocation0 [shape = 'u32[]', space=smem, size = 0x4, offset = 0x4, fixed_abs, tag = 'smem constant byte address 0x4 - core index']
  #allocation1 [shape = 'u32[72,128]{1,0:T(1,128)}', space=vmem, size = 0x9000, scoped, tag = 'internal scratch']
  %s0 = inlined_call_operand.vmem [shape: f32[8,32], index: 0, kind: input, shape index: {}]
  %s1 = inlined_call_operand.vmem [shape: bf16[32,256], index: 1, kind: input, shape index: {}]
  %s2 = inlined_call_operand.vmem [shape: f32[1,256], index: 2, kind: input, shape index: {}]
  %s3 = inlined_call_operand.vmem [shape: bf16[256,16], index: 3, kind: input, shape index: {}]
  %s4 = inlined_call_operand.vmem [shape: f32[1,16], index: 4, kind: input, shape index: {}]
  %s5 = inlined_call_operand.hbm [shape: f32[8,16], index: 5, kind: output, shape index: {}]
  %s6 = sld [smem:[#allocation0]]
  $region30: #{simplenet_forward.1} parent=0
    _
  %s8 = ssub.s32 1, %s6
  %s9 = scalar_select 0, %s8, %s6
  $region1: #{simplenet_forward.1} parent=0
    #allocation2 [shape = 'u8[4096]{0}', space=vmem, size = 0x1000, scoped, tag = 'output window, operand 0, single buffered']
    #allocation3 [shape = 's32[1]{0}', space=sflag, size = 0x4, scoped, tag = 'scoped memory for simplenet_forward.1']
    %10 = vsyncpa [#allocation3], 0
    // Predicated region
    $region2: #{simplenet_forward.1} parent=1 // pred_check
      _
    $region3: #{simplenet_forward.1} parent=1 // pred_check_branch
      %12 = sbr.rel (0) target = $region5
    $region4: #{simplenet_forward.1} parent=1 // pred_region
      _
    $region5: #{simplenet_forward.1} parent=1 // pred_fallthru
      _
    // Predicated region
    $region6: #{simplenet_forward.1} parent=1 // pred_check
      _
    $region7: #{simplenet_forward.1} parent=1 // pred_check_branch
      %14 = sbr.rel (0) target = $region9
    $region8: #{simplenet_forward.1} parent=1 // pred_region
      _
    $region9: #{simplenet_forward.1} parent=1 // pred_fallthru
      _
    // Predicated region
    $region10: #{simplenet_forward.1} parent=1 // pred_check
      _
    $region11: #{simplenet_forward.1} parent=1 // pred_check_branch
      %16 = sbr.rel (0) target = $region13
    $region12: #{simplenet_forward.1} parent=1 // pred_region
      _
    $region13: #{simplenet_forward.1} parent=1 // pred_fallthru
      _
    // Predicated region
    $region14: #{simplenet_forward.1} parent=1 // pred_check
      _
    $region15: #{simplenet_forward.1} parent=1 // pred_check_branch
      %18 = sbr.rel (0) target = $region17
    $region16: #{simplenet_forward.1} parent=1 // pred_region
      _
    $region17: #{simplenet_forward.1} parent=1 // pred_fallthru
      _
    // Predicated region
    $region18: #{simplenet_forward.1} parent=1 // pred_check
      _
    $region19: #{simplenet_forward.1} parent=1 // pred_check_branch
      %20 = sbr.rel (0) target = $region21
    $region20: #{simplenet_forward.1} parent=1 // pred_region
      _
    $region21: #{simplenet_forward.1} parent=1 // pred_fallthru
      _
    %v22 = vld [vmem:[%s0] sm:$0xff]
    %v23 = vpack.c.bf16 %v22, %v22
    %v24 = vld [vmem:[%s1] sm:$0xff]
    %v25 = vld [vmem:[%s1 + $0x8] sm:$0xff]
    %v26 = vld [vmem:[%s1 + $0x10] sm:$0xff]
    %v27 = vld [vmem:[%s1 + $0x18] sm:$0xff]
    %v28 = vld [vmem:[%s2] sm:$0x3]
    %v30 = vperm.slane %v28, 0
    %v31 = vperm.slane %v28, 1
    %v38 = vunpack.c.l.b16 %v24
    %v39 = vunpack.c.h.b16 %v24
    %v40 = vunpack.c.l.b16 %v25
    %v41 = vunpack.c.h.b16 %v25
    %v42 = vunpack.c.l.b16 %v26
    %v43 = vunpack.c.h.b16 %v26
    %v44 = vunpack.c.l.b16 %v27
    %v45 = vunpack.c.h.b16 %v27
    %v46 = vpack.c.b16 %v40, %v38
    %v47 = vpack.c.b16 %v41, %v39
    %v48 = vpack.c.b16 %v44, %v42
    %v49 = vpack.c.b16 %v45, %v43
    %vm54 = vcmask 261120
    %v56 = vsel %vm54, %v23, 0
    %58 = vmatpush.bf16.msra.mxu0 0
    %59 = vmatpush.bf16.msra.mxu0 0
    %60 = vmatpush.bf16.msra.mxu0 0
    %61 = vmatpush.bf16.msra.mxu0 0
    %62 = vmatpush.bf16.msra.mxu0 0
    %63 = vmatpush.bf16.msra.mxu0 0
    %64 = vmatpush.bf16.msra.mxu0 %v48
    %65 = vmatpush.bf16.msra.mxu0 %v46
    %66 = vmatmul.bf16.gmra.mxu0 %v56
    %v67 = vpop.f32.mrf.mxu0
    %v68 = vadd.f32 %v30, %v67
    %v69 = vpop.f32.mrf.mxu0
    %70 = vdwg.mxu0
    %71 = vmatpush.bf16.msra.mxu0 0
    %72 = vmatpush.bf16.msra.mxu0 0
    %73 = vmatpush.bf16.msra.mxu0 0
    %74 = vmatpush.bf16.msra.mxu0 0
    %75 = vmatpush.bf16.msra.mxu0 0
    %76 = vmatpush.bf16.msra.mxu0 0
    %77 = vmatpush.bf16.msra.mxu0 %v49
    %78 = vmatpush.bf16.msra.mxu0 %v47
    %79 = vmatmul.bf16.gmra.mxu0 %v56
    %v80 = vpop.f32.mrf.mxu0
    %v81 = vadd.f32 %v31, %v80
    %v82 = vpop.f32.mrf.mxu0
    %83 = vdwg.mxu0
    %v84 = vmul.f32 %v68, 0.5
    %v85 = vmul.f32 %v81, 0.5
    %v86 = vtanh.pop %v84
    %v87 = vtanh.pop %v85
    %v88 = vmul.f32 %v86, 0.5
    %v89 = vmul.f32 %v87, 0.5
    %v90 = vadd.f32 %v88, 0.5
    %v91 = vadd.f32 %v89, 0.5
    %v92 = vpack.c.bf16 %v90, %v90
    %v93 = vpack.c.bf16 %v91, %v91
    %v94 = vld [vmem:[%s3] sm:$0xf]
    %v95 = vld [vmem:[%s3 + $0x4] sm:$0xf]
    %v96 = vld [vmem:[%s3 + $0x8] sm:$0xf]
    %v97 = vld [vmem:[%s3 + $0xc] sm:$0xf]
    %v98 = vld [vmem:[%s3 + $0x10] sm:$0xf]
    %v99 = vld [vmem:[%s3 + $0x14] sm:$0xf]
    %v100 = vld [vmem:[%s3 + $0x18] sm:$0xf]
    %v101 = vld [vmem:[%s3 + $0x1c] sm:$0xf]
    %v102 = vld [vmem:[%s3 + $0x20] sm:$0xf]
    %v103 = vld [vmem:[%s3 + $0x24] sm:$0xf]
    %v104 = vld [vmem:[%s3 + $0x28] sm:$0xf]
    %v105 = vld [vmem:[%s3 + $0x2c] sm:$0xf]
    %v106 = vld [vmem:[%s3 + $0x30] sm:$0xf]
    %v107 = vld [vmem:[%s3 + $0x34] sm:$0xf]
    %v108 = vld [vmem:[%s3 + $0x38] sm:$0xf]
    %v109 = vld [vmem:[%s3 + $0x3c] sm:$0xf]
    %v110 = vld [vmem:[%s3 + $0x40] sm:$0xf]
    %v111 = vld [vmem:[%s3 + $0x44] sm:$0xf]
    %v112 = vld [vmem:[%s3 + $0x48] sm:$0xf]
    %v113 = vld [vmem:[%s3 + $0x4c] sm:$0xf]
    %v114 = vld [vmem:[%s3 + $0x50] sm:$0xf]
    %v115 = vld [vmem:[%s3 + $0x54] sm:$0xf]
    %v116 = vld [vmem:[%s3 + $0x58] sm:$0xf]
    %v117 = vld [vmem:[%s3 + $0x5c] sm:$0xf]
    %v118 = vld [vmem:[%s3 + $0x60] sm:$0xf]
    %v119 = vld [vmem:[%s3 + $0x64] sm:$0xf]
    %v120 = vld [vmem:[%s3 + $0x68] sm:$0xf]
    %v121 = vld [vmem:[%s3 + $0x6c] sm:$0xf]
    %v122 = vld [vmem:[%s3 + $0x70] sm:$0xf]
    %v123 = vld [vmem:[%s3 + $0x74] sm:$0xf]
    %v124 = vld [vmem:[%s3 + $0x78] sm:$0xf]
    %v125 = vld [vmem:[%s3 + $0x7c] sm:$0xf]
    %v126 = vld [vmem:[%s4] sm:$0x1]
    %v128 = vperm.slane %v126, 0
    %v162 = vunpack.c.l.b16 %v94
    %v163 = vunpack.c.l.b16 %v95
    %v164 = vunpack.c.l.b16 %v96
    %v165 = vunpack.c.l.b16 %v97
    %v166 = vunpack.c.l.b16 %v98
    %v167 = vunpack.c.l.b16 %v99
    %v168 = vunpack.c.l.b16 %v100
    %v169 = vunpack.c.l.b16 %v101
    %v170 = vunpack.c.l.b16 %v102
    %v171 = vunpack.c.l.b16 %v103
    %v172 = vunpack.c.l.b16 %v104
    %v173 = vunpack.c.l.b16 %v105
    %v174 = vunpack.c.l.b16 %v106
    %v175 = vunpack.c.l.b16 %v107
    %v176 = vunpack.c.l.b16 %v108
    %v177 = vunpack.c.l.b16 %v109
    %v178 = vunpack.c.l.b16 %v110
    %v179 = vunpack.c.l.b16 %v111
    %v180 = vunpack.c.l.b16 %v112
    %v181 = vunpack.c.l.b16 %v113
    %v182 = vunpack.c.l.b16 %v114
    %v183 = vunpack.c.l.b16 %v115
    %v184 = vunpack.c.l.b16 %v116
    %v185 = vunpack.c.l.b16 %v117
    %v186 = vunpack.c.l.b16 %v118
    %v187 = vunpack.c.l.b16 %v119
    %v188 = vunpack.c.l.b16 %v120
    %v189 = vunpack.c.l.b16 %v121
    %v190 = vunpack.c.l.b16 %v122
    %v191 = vunpack.c.l.b16 %v123
    %v192 = vunpack.c.l.b16 %v124
    %v193 = vunpack.c.l.b16 %v125
    %v194 = vpack.c.b16 %v163, %v162
    %v195 = vpack.c.b16 %v165, %v164
    %v196 = vpack.c.b16 %v167, %v166
    %v197 = vpack.c.b16 %v169, %v168
    %v198 = vpack.c.b16 %v171, %v170
    %v199 = vpack.c.b16 %v173, %v172
    %v200 = vpack.c.b16 %v175, %v174
    %v201 = vpack.c.b16 %v177, %v176
    %v202 = vpack.c.b16 %v179, %v178
    %v203 = vpack.c.b16 %v181, %v180
    %v204 = vpack.c.b16 %v183, %v182
    %v205 = vpack.c.b16 %v185, %v184
    %v206 = vpack.c.b16 %v187, %v186
    %v207 = vpack.c.b16 %v189, %v188
    %v208 = vpack.c.b16 %v191, %v190
    %v209 = vpack.c.b16 %v193, %v192
    %226 = vmatpush.bf16.msra.mxu0 %v201
    %227 = vmatpush.bf16.msra.mxu0 %v200
    %228 = vmatpush.bf16.msra.mxu0 %v199
    %229 = vmatpush.bf16.msra.mxu0 %v198
    %230 = vmatpush.bf16.msra.mxu0 %v197
    %231 = vmatpush.bf16.msra.mxu0 %v196
    %232 = vmatpush.bf16.msra.mxu0 %v195
    %233 = vmatpush.bf16.msra.mxu0 %v194
    %234 = vmatmul.bf16.gmra.mxu0 %v92
    %v235 = vpop.f32.mrf.mxu0
    %v236 = vadd.f32 %v128, %v235
    %v237 = vpop.f32.mrf.mxu0
    %238 = vdwg.mxu0
    %239 = vmatpush.bf16.msra.mxu0 %v209
    %240 = vmatpush.bf16.msra.mxu0 %v208
    %241 = vmatpush.bf16.msra.mxu0 %v207
    %242 = vmatpush.bf16.msra.mxu0 %v206
    %243 = vmatpush.bf16.msra.mxu0 %v205
    %244 = vmatpush.bf16.msra.mxu0 %v204
    %245 = vmatpush.bf16.msra.mxu0 %v203
    %246 = vmatpush.bf16.msra.mxu0 %v202
    %247 = vmatmul.bf16.gmra.mxu0 %v93
    %v248 = vpop.f32.mrf.mxu0
    %v249 = vadd.f32 %v236, %v248
    %v250 = vpop.f32.mrf.mxu0
    %251 = vdwg.mxu0
    %v252 = vmul.f32 %v249, 0.01
    %v253 = vmax.f32 %v249, %v252
    %vm254 = vcmask 130048
    %255 = vst.msk [vmem:[#allocation2] sm:$0xff] %vm254, %v253
    // Predicated region
    $region22: #{simplenet_forward.1} parent=1 // pred_check
      _
    $region23: #{simplenet_forward.1} parent=1 // pred_check_branch
      %257 = sbr.rel (0) target = $region25
    $region24: #{simplenet_forward.1} parent=1 // pred_region
      %259 = vsyncadd [#allocation3], 0
      %s261 = sshll.u32 [#allocation2], 4
      %s262 = int_to_ptr.vmem [resolvable:$true] %s261
      %s263 = sshll.u32 %s5, 4
      %s264 = int_to_ptr.hbm [resolvable:$true] %s263
      %266 = dma.vmem_to_hbm [thread:$0]  %s262, 128, %s264, [#allocation3]
    $region25: #{simplenet_forward.1} parent=1 // pred_fallthru
      _
    // Predicated region
    $region26: #{simplenet_forward.1} parent=1 // pred_check
      _
    $region27: #{simplenet_forward.1} parent=1 // pred_check_branch
      %268 = sbr.rel (0) target = $region29
    $region28: #{simplenet_forward.1} parent=1 // pred_region
      %270 = dma.done [#allocation3], 128
    $region29: #{simplenet_forward.1} parent=1 // pred_fallthru
      _
    %271 = vsyncpa [#allocation3], 1

</llo_original>
